<compile_context>
chip_gen: v6e
topology: v6e:2x2x1
jax: 0.10.0
libtpu: 0.0.40
codegen_flags: <defaults>
</compile_context>

<pallas_src>
import jax
import jax.numpy as jnp
from jax import lax
from jax.experimental import pallas as pl
from jax.experimental.pallas import tpu as pltpu


def _round_up(x, m):
    return (x + m - 1) // m * m


# ---------------------------------------------------------------------------
# Kernel 1: bulk input projection  gx = x @ W_ih + b  (all timesteps at once).
# bf16 operands, f32 MXU accumulation, bf16 result (halves the HBM stream that
# feeds the recurrence kernel).
# ---------------------------------------------------------------------------
def _proj_kernel(x_ref, w_ref, b_ref, o_ref):
    acc = jnp.dot(x_ref[...], w_ref[...], preferred_element_type=jnp.float32)
    o_ref[...] = (acc + b_ref[...]).astype(o_ref.dtype)


def _input_projection(x_flat, w_ih, b):
    """x_flat: (R, E) bf16, w_ih: (E, G) bf16, b: (1, G) f32 -> (R, G) bf16."""
    R, E = x_flat.shape
    G = w_ih.shape[1]
    tm = min(512, _round_up(R, 8))       # large row tile: this matmul is HBM-bound
    Rp = _round_up(R, tm)
    if Rp != R:
        x_flat = jnp.pad(x_flat, ((0, Rp - R), (0, 0)))

    out = pl.pallas_call(
        _proj_kernel,
        out_shape=jax.ShapeDtypeStruct((Rp, G), jnp.bfloat16),
        grid_spec=pltpu.PrefetchScalarGridSpec(
            num_scalar_prefetch=0,
            grid=(Rp // tm,),
            in_specs=[
                pl.BlockSpec((tm, E), lambda i: (i, 0)),
                # TODO(synk): pipeline_mode=pl.Buffered(1) on these
                # grid-invariant W_ih / bias blocks would reclaim one VMEM
                # buffer each (only matters for very large E * 4H).
                pl.BlockSpec((E, G), lambda i: (0, 0)),
                pl.BlockSpec((1, G), lambda i: (0, 0)),
            ],
            out_specs=pl.BlockSpec((tm, G), lambda i: (i, 0)),
        ),
        compiler_params=pltpu.CompilerParams(
            dimension_semantics=("parallel",),
            vmem_limit_bytes=48 * 1024 * 1024),
    )(x_flat, w_ih, b)
    return out[:R]


# ---------------------------------------------------------------------------
# Kernel 2: LSTM recurrence.
#   grid = (batch blocks ["parallel"], time chunks ["arbitrary"])
#   h/c carried across time chunks in VMEM scratch; the T_CHUNK-step serial
#   loop runs inside the kernel (fori_loop, unroll=2).
# ---------------------------------------------------------------------------
def _make_recurrence_kernel(s_real, s_pad, t_chunk):
    needs_mask = s_pad != s_real          # static: only when S was padded up
    unroll = 2 if t_chunk >= 2 else 1

    def kernel(gx_ref, w_hh_ref, h0_ref, c0_ref,
               out_ref, hT_ref, cT_ref, h_sc, c_sc):
        t_blk = pl.program_id(1)
        Hp = h0_ref.shape[-1]
        w_hh = w_hh_ref[...]              # bf16, VMEM-resident for the chunk

        @pl.when(t_blk == 0)
        def _():
            h_sc[...] = h0_ref[...]
            c_sc[...] = c0_ref[...]

        def step(t, carry):
            h_prev, c_prev = carry        # f32 state
            gates = gx_ref[t].astype(jnp.float32) + jnp.dot(
                h_prev.astype(jnp.bfloat16), w_hh,
                preferred_element_type=jnp.float32)
            # Hp is a multiple of 128 -> every gate slice is lane-aligned.
            i_g = jax.nn.sigmoid(gates[:, 0 * Hp:1 * Hp])
            f_g = jax.nn.sigmoid(gates[:, 1 * Hp:2 * Hp])
            g_g = jnp.tanh(gates[:, 2 * Hp:3 * Hp])
            o_g = jax.nn.sigmoid(gates[:, 3 * Hp:4 * Hp])
            c_new = f_g * c_prev + i_g * g_g
            h_new = o_g * jnp.tanh(c_new)
            if needs_mask:
                # Freeze the carry on padded tail steps (global step >= S).
                keep = ((t_blk * t_chunk + t) < s_real).astype(jnp.float32)
                h_new = h_prev + keep * (h_new - h_prev)
                c_new = c_prev + keep * (c_new - c_prev)
            out_ref[t] = h_new            # unmasked lane-aligned store
            return h_new, c_new

        h_fin, c_fin = lax.fori_loop(0, t_chunk, step,
                                     (h_sc[...], c_sc[...]), unroll=unroll)
        h_sc[...] = h_fin
        c_sc[...] = c_fin

        @pl.when(t_blk == pl.num_programs(1) - 1)
        def _():
            hT_ref[...] = h_fin
            cT_ref[...] = c_fin

    return kernel


def lstm_forward_pallas(x, w_ih, w_hh, b, h0, c0, *, t_chunk=None):
    """x: (S, B, E) f32; w_ih: (E, 4H); w_hh: (H, 4H); b: (1, 4H); h0/c0: (B, H)."""
    S, B, E = x.shape
    H = h0.shape[-1]
    Hp = _round_up(H, 128)                # lane-align each gate block

    # Batch blocking: use as many MXU rows as the batch provides (<=128).
    B_BLK = min(128, _round_up(B, 8))
    Bp = _round_up(B, B_BLK)
    nb = Bp // B_BLK
    # TODO(synk): on v7x, when Bp >= 2*B_BLK keep nb even so the "parallel"
    # batch axis shards across both TensorCores.

    # Time chunk sized from a VMEM budget that also fits v7x (64 MiB physical,
    # ~48 MiB usable scoped): double-buffered bf16 gx chunk + f32 out chunk.
    VMEM_BUDGET = 32 * 1024 * 1024
    bytes_per_step = 2 * B_BLK * (4 * Hp * 2 + Hp * 4)   # 2 pipeline buffers
    if t_chunk is None:
        T_CHUNK = max(8, min(256, VMEM_BUDGET // bytes_per_step))
    else:
        T_CHUNK = t_chunk
    T_CHUNK = min(T_CHUNK, S)
    Sp = _round_up(S, T_CHUNK)
    nt = Sp // T_CHUNK

    # --- pad parameters so each gate occupies a full Hp-wide lane tile ------
    def pad_gates(w, in_pad):
        # w: (I, 4H) -> (I + in_pad, 4*Hp); each [i|f|g|o] block zero-padded.
        chunks = [w[:, k * H:(k + 1) * H] for k in range(4)]
        chunks = [jnp.pad(ch, ((0, in_pad), (0, Hp - H))) for ch in chunks]
        return jnp.concatenate(chunks, axis=1)

    w_ih_p = pad_gates(w_ih, 0).astype(jnp.bfloat16)        # (E, 4*Hp)
    w_hh_p = pad_gates(w_hh, Hp - H).astype(jnp.bfloat16)   # (Hp, 4*Hp), zero rows
    b_p = pad_gates(b, 0)                                    # (1, 4*Hp) f32

    x_p = jnp.pad(x, ((0, 0), (0, Bp - B), (0, 0)))          # (S, Bp, E)
    h0_p = jnp.pad(h0, ((0, Bp - B), (0, Hp - H)))           # zero padding required
    c0_p = jnp.pad(c0, ((0, Bp - B), (0, Hp - H)))

    # --- bulk input projection (bias folded in once); bf16 gx intermediate --
    gx = _input_projection(
        x_p.reshape(S * Bp, E).astype(jnp.bfloat16), w_ih_p, b_p)
    gx = gx.reshape(S, Bp, 4 * Hp)
    if Sp != S:
        gx = jnp.pad(gx, ((0, Sp - S), (0, 0), (0, 0)))

    kernel = _make_recurrence_kernel(S, Sp, T_CHUNK)

    out, h_n, c_n = pl.pallas_call(
        kernel,
        out_shape=(
            jax.ShapeDtypeStruct((Sp, Bp, Hp), jnp.float32),
            jax.ShapeDtypeStruct((Bp, Hp), jnp.float32),
            jax.ShapeDtypeStruct((Bp, Hp), jnp.float32),
        ),
        grid_spec=pltpu.PrefetchScalarGridSpec(
            num_scalar_prefetch=0,
            grid=(nb, nt),           # batch blocks (parallel) x time chunks (serial)
            in_specs=[
                pl.BlockSpec((T_CHUNK, B_BLK, 4 * Hp), lambda bi, ti: (ti, bi, 0)),
                # TODO(synk): pipeline_mode=pl.Buffered(1) — W_hh is grid-invariant.
                pl.BlockSpec((Hp, 4 * Hp), lambda bi, ti: (0, 0)),
                pl.BlockSpec((B_BLK, Hp), lambda bi, ti: (bi, 0)),
                pl.BlockSpec((B_BLK, Hp), lambda bi, ti: (bi, 0)),
            ],
            out_specs=[
                pl.BlockSpec((T_CHUNK, B_BLK, Hp), lambda bi, ti: (ti, bi, 0)),
                pl.BlockSpec((B_BLK, Hp), lambda bi, ti: (bi, 0)),
                pl.BlockSpec((B_BLK, Hp), lambda bi, ti: (bi, 0)),
            ],
            scratch_shapes=[
                pltpu.VMEM((B_BLK, Hp), jnp.float32),    # h carry across chunks
                pltpu.VMEM((B_BLK, Hp), jnp.float32),    # c carry across chunks
            ],
        ),
        compiler_params=pltpu.CompilerParams(
            dimension_semantics=("parallel", "arbitrary"),
            vmem_limit_bytes=48 * 1024 * 1024),
    )(gx, w_hh_p, h0_p, c0_p)

    # Strip padding.
    return out[:S, :B, :H], h_n[:B, :H], c_n[:B, :H]


class LSTMEncoderPallas:
    """JAX/Pallas port of lstm_siamese.train.LSTMEncoder (forward only)."""

    def __init__(self, key, vocab_size, embedding_dims, hidden_dims):
        self.vocab_size = vocab_size
        self.embedding_dims = embedding_dims
        self.hidden_dims = hidden_dims
        kE, k1, k2, k3, k4 = jax.random.split(key, 5)

        # nn.Embedding: N(0,1) init, padding_idx=0 row zeroed.
        emb = jax.random.normal(kE, (vocab_size, embedding_dims), jnp.float32)
        self.embedding = emb.at[0].set(0.0)

        # nn.LSTM params: uniform(-1/sqrt(H), 1/sqrt(H)), gate order [i,f,g,o].
        H, E = hidden_dims, embedding_dims
        s = 1.0 / jnp.sqrt(H)
        self.w_ih = jax.random.uniform(k1, (E, 4 * H), jnp.float32, -s, s)
        self.w_hh = jax.random.uniform(k2, (H, 4 * H), jnp.float32, -s, s)
        b_ih = jax.random.uniform(k3, (4 * H,), jnp.float32, -s, s)
        b_hh = jax.random.uniform(k4, (4 * H,), jnp.float32, -s, s)
        self.b = (b_ih + b_hh).reshape(1, 4 * H)

        # Dropout(dropout_p) is defined in __init__ but never applied in forward.

    def init_hidden(self, key, batch_size):
        ka, kb = jax.random.split(key)
        h = jax.random.normal(ka, (1, batch_size, self.hidden_dims), jnp.float32)
        c = jax.random.normal(kb, (1, batch_size, self.hidden_dims), jnp.float32)
        return h, c

    def __call__(self, data, batch_size, hidden):
        # data: (S, B) int32 token ids
        emb = jnp.take(self.embedding, data, axis=0)                # (S, B, E)
        x = emb.reshape(-1, batch_size, self.embedding_dims)        # .view(-1, B, E)
        h0, c0 = hidden
        out, h_n, c_n = lstm_forward_pallas(
            x, self.w_ih, self.w_hh, self.b, h0[0], c0[0])
        return out, (h_n[None], c_n[None])


def _reference_lstm(x, w_ih, w_hh, b, h0, c0):
    """Pure-JAX f32 reference (lax.scan) for correctness checking."""
    H = h0.shape[-1]

    def step(carry, x_t):
        h, c = carry
        gates = x_t @ w_ih + h @ w_hh + b
        i = jax.nn.sigmoid(gates[:, 0 * H:1 * H])
        f = jax.nn.sigmoid(gates[:, 1 * H:2 * H])
        g = jnp.tanh(gates[:, 2 * H:3 * H])
        o = jax.nn.sigmoid(gates[:, 3 * H:4 * H])
        c = f * c + i * g
        h = o * jnp.tanh(c)
        return (h, c), h

    (h_n, c_n), out = jax.lax.scan(step, (h0, c0), x)
    return out, h_n, c_n


if __name__ == "__main__":
    # Small shapes consistent with the module (vocab, embed, hidden scaled down).
    VOCAB, EMBED, HIDDEN = 128, 64, 32
    SEQ, BATCH = 8, 4

    key = jax.random.PRNGKey(0)
    k_model, k_data, k_hidden = jax.random.split(key, 3)

    model = LSTMEncoderPallas(k_model, VOCAB, EMBED, HIDDEN)
    data = jax.random.randint(k_data, (SEQ, BATCH), 0, VOCAB, dtype=jnp.int32)
    hidden = model.init_hidden(k_hidden, BATCH)

    out, (h_n, c_n) = model(data, BATCH, hidden)
    out = jax.block_until_ready(out)
    h_n = jax.block_until_ready(h_n)
    c_n = jax.block_until_ready(c_n)

    # Correctness vs pure-JAX f32 reference.  bf16 matmul operands / bf16 gx
    # intermediate => loosened tolerance (f32 accumulation + f32 gate math).
    TOL = dict(atol=4e-2, rtol=4e-2)
    x = jnp.take(model.embedding, data, axis=0).reshape(-1, BATCH, EMBED)
    ref_out, ref_h, ref_c = _reference_lstm(
        x, model.w_ih, model.w_hh, model.b, hidden[0][0], hidden[1][0])
    assert out.shape == (SEQ, BATCH, HIDDEN)
    assert h_n.shape == (1, BATCH, HIDDEN) and c_n.shape == (1, BATCH, HIDDEN)
    assert jnp.allclose(out, ref_out, **TOL)
    assert jnp.allclose(h_n[0], ref_h, **TOL)
    assert jnp.allclose(c_n[0], ref_c, **TOL)

    # Second config: longer sequence with a forced small time chunk so the
    # multi-chunk h/c carry and ragged-tail masking paths are exercised.
    SEQ2 = 20
    data2 = jax.random.randint(jax.random.PRNGKey(1), (SEQ2, BATCH), 0, VOCAB,
                               dtype=jnp.int32)
    x2 = jnp.take(model.embedding, data2, axis=0).reshape(-1, BATCH, EMBED)
    out2, h2, c2 = lstm_forward_pallas(
        x2, model.w_ih, model.w_hh, model.b, hidden[0][0], hidden[1][0],
        t_chunk=8)
    out2 = jax.block_until_ready(out2)
    ref_out2, ref_h2, ref_c2 = _reference_lstm(
        x2, model.w_ih, model.w_hh, model.b, hidden[0][0], hidden[1][0])
    assert jnp.allclose(out2, ref_out2, **TOL)
    assert jnp.allclose(h2, ref_h2, **TOL)
    assert jnp.allclose(c2, ref_c2, **TOL)

    print("KERNEL_OK")
</pallas_src>

<mosaic_0001>
module attributes {stable_mosaic.version = 11 : i64} {
  func.func @_proj_kernel(%arg0: i32, %arg1: memref<64x64xbf16, #tpu.memory_space<vmem>>, %arg2: memref<64x512xbf16, #tpu.memory_space<vmem>>, %arg3: memref<1x512xf32, #tpu.memory_space<vmem>>, %arg4: memref<64x512xbf16, #tpu.memory_space<vmem>>) attributes {dimension_semantics = [#tpu.dimension_semantics<parallel>], iteration_bounds = array<i64: 1>, scalar_prefetch = 0 : i64, scratch_operands = 0 : i64, tpu.core_type = #tpu.core_type<tc>, window_params = [{transform_indices = @transform_0, window_bounds = array<i64: 64, 64>}, {pipeline_mode = #tpu.pipeline_mode<synchronous>, transform_indices = @transform_1, window_bounds = array<i64: 64, 512>}, {pipeline_mode = #tpu.pipeline_mode<synchronous>, transform_indices = @transform_2, window_bounds = array<i64: 1, 512>}, {transform_indices = @transform_3, window_bounds = array<i64: 64, 512>}]} {
    %c0 = arith.constant 0 : index
    %c0_0 = arith.constant 0 : index
    %0 = vector.load %arg1[%c0, %c0_0] : memref<64x64xbf16, #tpu.memory_space<vmem>>, vector<64x64xbf16>
    %c0_1 = arith.constant 0 : index
    %c0_2 = arith.constant 0 : index
    %1 = vector.load %arg2[%c0_1, %c0_2] : memref<64x512xbf16, #tpu.memory_space<vmem>>, vector<64x512xbf16>
    %cst = arith.constant dense<0.000000e+00> : vector<64x512xf32>
    %2 = tpu.matmul %0, %1, %cst {dimension_numbers = #tpu.dot_dimension_numbers<[1], [0], [0], [1], [0, 0, 1, 1], [], []>} : vector<64x64xbf16>, vector<64x512xbf16>, vector<64x512xf32> -> vector<64x512xf32>
    %c0_3 = arith.constant 0 : index
    %c0_4 = arith.constant 0 : index
    %3 = vector.load %arg3[%c0_3, %c0_4] : memref<1x512xf32, #tpu.memory_space<vmem>>, vector<1x512xf32>
    %4 = vector.broadcast %3 : vector<1x512xf32> to vector<64x512xf32>
    %5 = arith.addf %2, %4 : vector<64x512xf32>
    %6 = arith.truncf %5 : vector<64x512xf32> to vector<64x512xbf16>
    %c0_5 = arith.constant 0 : index
    %c0_6 = arith.constant 0 : index
    %7 = vector.load %arg4[%c0_5, %c0_6] : memref<64x512xbf16, #tpu.memory_space<vmem>>, vector<64x512xbf16>
    tpu.vector_store %arg4[%c0_5, %c0_6], %6 {strides = array<i32>} : memref<64x512xbf16, #tpu.memory_space<vmem>>, vector<64x512xbf16>,
    return
  }
  func.func @transform_0(%arg0: i32) -> (i32, i32) {
    %c0_i32 = arith.constant 0 : i32
    %c0_i32_0 = arith.constant 0 : i32
    return %arg0, %c0_i32 : i32, i32
  }
  func.func @transform_1(%arg0: i32) -> (i32, i32) {
    %c0_i32 = arith.constant 0 : i32
    %c0_i32_0 = arith.constant 0 : i32
    %c0_i32_1 = arith.constant 0 : i32
    return %c0_i32, %c0_i32_0 : i32, i32
  }
  func.func @transform_2(%arg0: i32) -> (i32, i32) {
    %c0_i32 = arith.constant 0 : i32
    %c0_i32_0 = arith.constant 0 : i32
    %c0_i32_1 = arith.constant 0 : i32
    return %c0_i32, %c0_i32_0 : i32, i32
  }
  func.func @transform_3(%arg0: i32) -> (i32, i32) {
    %c0_i32 = arith.constant 0 : i32
    %c0_i32_0 = arith.constant 0 : i32
    return %arg0, %c0_i32 : i32, i32
  }
}

</mosaic_0001>

<llo_original>
// kernel: tpu_custom_call.1
$region0: #{tpu_custom_call.1}
  #allocation0 [shape = 'u32[]', space=smem, size = 0x4, offset = 0x4, fixed_abs, tag = 'smem constant byte address 0x4 - core index']
  #allocation1 [shape = 'u32[144,128]{1,0:T(1,128)}', space=vmem, size = 0x12000, scoped, tag = 'internal scratch']
  %s0 = inlined_call_operand.hbm [shape: bf16[64,64], index: 0, kind: input, shape index: {}]
  %s1 = inlined_call_operand.hbm [shape: bf16[64,512], index: 1, kind: input, shape index: {}]
  %s2 = inlined_call_operand.hbm [shape: f32[1,512], index: 2, kind: input, shape index: {}]
  %s3 = inlined_call_operand.hbm [shape: bf16[64,512], index: 3, kind: output, shape index: {}]
  %s4 = sld [smem:[#allocation0]]
  $region34: #{tpu_custom_call.1} parent=0
    _
  %s6 = ssub.s32 1, %s4
  %s7 = scalar_select 0, %s6, %s4
  $region1: #{tpu_custom_call.1} parent=0
    #allocation2 [shape = 'u8[16384]{0}', space=vmem, size = 0x4000, scoped, tag = 'input window, operand 0, single buffered']
    #allocation3 [shape = 's32[1]{0}', space=sflag, size = 0x4, scoped, tag = 'scoped memory for tpu_custom_call.1']
    #allocation4 [shape = 's32[1]{0}', space=sflag, size = 0x4, scoped, tag = 'scoped memory for tpu_custom_call.1']
    #allocation5 [shape = 'u8[65536]{0}', space=vmem, size = 0x10000, scoped, tag = 'input window, operand 1, single buffered']
    #allocation6 [shape = 's32[1]{0}', space=sflag, size = 0x4, scoped, tag = 'scoped memory for tpu_custom_call.1']
    #allocation7 [shape = 'u8[2048]{0}', space=vmem, size = 0x800, scoped, tag = 'input window, operand 2, single buffered']
    #allocation8 [shape = 'u8[65536]{0}', space=vmem, size = 0x10000, scoped, tag = 'output window, operand 0, single buffered']
    %8 = vsyncpa [#allocation3], 0
    %9 = vsyncpa [#allocation6], 0
    %10 = vsyncpa [#allocation4], 0
    // Predicated region
    $region2: #{tpu_custom_call.1} parent=1 // pred_check
      _
    $region3: #{tpu_custom_call.1} parent=1 // pred_check_branch
      %12 = sbr.rel (0) target = $region5
    $region4: #{tpu_custom_call.1} parent=1 // pred_region
      %s14 = ssub.s32 512, 512
      %15 = vsyncadd [#allocation3], %s14
      %s16 = sshll.u32 [#allocation2], 4
      %s17 = int_to_ptr.vmem [resolvable:$true] %s16
      %22 = dma.hbm_to_vmem [thread:$0]  %s0, 512, %s17, [#allocation3], 64, 64, 4
    $region5: #{tpu_custom_call.1} parent=1 // pred_fallthru
      _
    // Predicated region
    $region6: #{tpu_custom_call.1} parent=1 // pred_check
      _
    $region7: #{tpu_custom_call.1} parent=1 // pred_check_branch
      %24 = sbr.rel (0) target = $region9
    $region8: #{tpu_custom_call.1} parent=1 // pred_region
      %s26 = ssub.s32 2048, 2048
      %27 = vsyncadd [#allocation6], %s26
      %s28 = sshll.u32 [#allocation5], 4
      %s29 = int_to_ptr.vmem [resolvable:$true] %s28
      %34 = dma.hbm_to_vmem [thread:$0]  %s1, 2048, %s29, [#allocation6], 256, 256, 16
    $region9: #{tpu_custom_call.1} parent=1 // pred_fallthru
      _
    // Predicated region
    $region10: #{tpu_custom_call.1} parent=1 // pred_check
      _
    $region11: #{tpu_custom_call.1} parent=1 // pred_check_branch
      %36 = sbr.rel (0) target = $region13
    $region12: #{tpu_custom_call.1} parent=1 // pred_region
      %s38 = ssub.s32 64, 64
      %39 = vsyncadd [#allocation6], %s38
      %s41 = sshll.u32 [#allocation7], 4
      %s42 = int_to_ptr.vmem [resolvable:$true] %s41
      %44 = dma.hbm_to_vmem [thread:$0]  %s2, 64, %s42, [#allocation6]
    $region13: #{tpu_custom_call.1} parent=1 // pred_fallthru
      _
    // Predicated region
    $region14: #{tpu_custom_call.1} parent=1 // pred_check
      _
    $region15: #{tpu_custom_call.1} parent=1 // pred_check_branch
      %46 = sbr.rel (0) target = $region17
    $region16: #{tpu_custom_call.1} parent=1 // pred_region
      %47 = dma.done [#allocation3], 512
    $region17: #{tpu_custom_call.1} parent=1 // pred_fallthru
      _
    // Predicated region
    $region18: #{tpu_custom_call.1} parent=1 // pred_check
      _
    $region19: #{tpu_custom_call.1} parent=1 // pred_check_branch
      %49 = sbr.rel (0) target = $region21
    $region20: #{tpu_custom_call.1} parent=1 // pred_region
      %50 = dma.done [#allocation6], 2048
    $region21: #{tpu_custom_call.1} parent=1 // pred_fallthru
      _
    // Predicated region
    $region22: #{tpu_custom_call.1} parent=1 // pred_check
      _
    $region23: #{tpu_custom_call.1} parent=1 // pred_check_branch
      %52 = sbr.rel (0) target = $region25
    $region24: #{tpu_custom_call.1} parent=1 // pred_region
      %53 = dma.done [#allocation6], 64
    $region25: #{tpu_custom_call.1} parent=1 // pred_fallthru
      _
    %v55 = vld [vmem:[#allocation2] sm:$0xf]
    %v56 = vld [vmem:[#allocation2 + $0x4] sm:$0xf]
    %v57 = vld [vmem:[#allocation2 + $0x8] sm:$0xf]
    %v58 = vld [vmem:[#allocation2 + $0xc] sm:$0xf]
    %v59 = vld [vmem:[#allocation2 + $0x10] sm:$0xf]
    %v60 = vld [vmem:[#allocation2 + $0x14] sm:$0xf]
    %v61 = vld [vmem:[#allocation2 + $0x18] sm:$0xf]
    %v62 = vld [vmem:[#allocation2 + $0x1c] sm:$0xf]
    %v63 = vld [vmem:[#allocation5] sm:$0xff]
    %v64 = vld [vmem:[#allocation5 + $0x8] sm:$0xff]
    %v65 = vld [vmem:[#allocation5 + $0x10] sm:$0xff]
    %v66 = vld [vmem:[#allocation5 + $0x18] sm:$0xff]
    %v67 = vld [vmem:[#allocation5 + $0x20] sm:$0xff]
    %v68 = vld [vmem:[#allocation5 + $0x28] sm:$0xff]
    %v69 = vld [vmem:[#allocation5 + $0x30] sm:$0xff]
    %v70 = vld [vmem:[#allocation5 + $0x38] sm:$0xff]
    %v71 = vld [vmem:[#allocation5 + $0x40] sm:$0xff]
    %v72 = vld [vmem:[#allocation5 + $0x48] sm:$0xff]
    %v73 = vld [vmem:[#allocation5 + $0x50] sm:$0xff]
    %v74 = vld [vmem:[#allocation5 + $0x58] sm:$0xff]
    %v75 = vld [vmem:[#allocation5 + $0x60] sm:$0xff]
    %v76 = vld [vmem:[#allocation5 + $0x68] sm:$0xff]
    %v77 = vld [vmem:[#allocation5 + $0x70] sm:$0xff]
    %v78 = vld [vmem:[#allocation5 + $0x78] sm:$0xff]
    %v79 = vld [vmem:[#allocation7] sm:$0xf]
    %v81 = vlaneseq
    %v82 = vshrl.u32 %v81, 7
    %v83 = vsub.s32 0, %v82
    %v84 = vrot.slane %v79, %v83
    %v85 = vlaneseq
    %v86 = vshrl.u32 %v85, 7
    %v87 = vsub.s32 1, %v86
    %v88 = vrot.slane %v79, %v87
    %v89 = vlaneseq
    %v90 = vshrl.u32 %v89, 7
    %v91 = vsub.s32 2, %v90
    %v92 = vrot.slane %v79, %v91
    %v93 = vlaneseq
    %v94 = vshrl.u32 %v93, 7
    %v95 = vsub.s32 3, %v94
    %v96 = vrot.slane %v79, %v95
    %v109 = vunpack.c.l.b16 %v55
    %v110 = vunpack.c.l.b16 %v56
    %v111 = vunpack.c.l.b16 %v57
    %v112 = vunpack.c.l.b16 %v58
    %v113 = vunpack.c.l.b16 %v59
    %v114 = vunpack.c.l.b16 %v60
    %v115 = vunpack.c.l.b16 %v61
    %v116 = vunpack.c.l.b16 %v62
    %v117 = vpack.c.b16 %v110, %v109
    %v118 = vpack.c.b16 %v112, %v111
    %v119 = vpack.c.b16 %v114, %v113
    %v120 = vpack.c.b16 %v116, %v115
    %v137 = vunpack.c.l.b16 %v63
    %v138 = vunpack.c.h.b16 %v63
    %v139 = vunpack.c.l.b16 %v64
    %v140 = vunpack.c.h.b16 %v64
    %v141 = vunpack.c.l.b16 %v65
    %v142 = vunpack.c.h.b16 %v65
    %v143 = vunpack.c.l.b16 %v66
    %v144 = vunpack.c.h.b16 %v66
    %v145 = vunpack.c.l.b16 %v67
    %v146 = vunpack.c.h.b16 %v67
    %v147 = vunpack.c.l.b16 %v68
    %v148 = vunpack.c.h.b16 %v68
    %v149 = vunpack.c.l.b16 %v69
    %v150 = vunpack.c.h.b16 %v69
    %v151 = vunpack.c.l.b16 %v70
    %v152 = vunpack.c.h.b16 %v70
    %v153 = vunpack.c.l.b16 %v71
    %v154 = vunpack.c.h.b16 %v71
    %v155 = vunpack.c.l.b16 %v72
    %v156 = vunpack.c.h.b16 %v72
    %v157 = vunpack.c.l.b16 %v73
    %v158 = vunpack.c.h.b16 %v73
    %v159 = vunpack.c.l.b16 %v74
    %v160 = vunpack.c.h.b16 %v74
    %v161 = vunpack.c.l.b16 %v75
    %v162 = vunpack.c.h.b16 %v75
    %v163 = vunpack.c.l.b16 %v76
    %v164 = vunpack.c.h.b16 %v76
    %v165 = vunpack.c.l.b16 %v77
    %v166 = vunpack.c.h.b16 %v77
    %v167 = vunpack.c.l.b16 %v78
    %v168 = vunpack.c.h.b16 %v78
    %v169 = vpack.c.b16 %v141, %v137
    %v170 = vpack.c.b16 %v142, %v138
    %v171 = vpack.c.b16 %v143, %v139
    %v172 = vpack.c.b16 %v144, %v140
    %v173 = vpack.c.b16 %v149, %v145
    %v174 = vpack.c.b16 %v150, %v146
    %v175 = vpack.c.b16 %v151, %v147
    %v176 = vpack.c.b16 %v152, %v148
    %v177 = vpack.c.b16 %v157, %v153
    %v178 = vpack.c.b16 %v158, %v154
    %v179 = vpack.c.b16 %v159, %v155
    %v180 = vpack.c.b16 %v160, %v156
    %v181 = vpack.c.b16 %v165, %v161
    %v182 = vpack.c.b16 %v166, %v162
    %v183 = vpack.c.b16 %v167, %v163
    %v184 = vpack.c.b16 %v168, %v164
    %vm201 = vcmask 523264
    %v203 = vsel %vm201, %v117, 0
    %v206 = vsel %vm201, %v118, 0
    %v209 = vsel %vm201, %v119, 0
    %v212 = vsel %vm201, %v120, 0
    %214 = vmatprep.subr.bf16.mxu0 0
    %215 = vmatpush1.bf16.msra.mxu0 0
    %216 = vmatprep.subr.bf16.mxu0 0
    %217 = vmatpush1.bf16.msra.mxu0 0
    %218 = vmatprep.subr.bf16.mxu0 0
    %219 = vmatpush1.bf16.msra.mxu0 0
    %220 = vmatprep.subr.bf16.mxu0 0
    %221 = vmatpush1.bf16.msra.mxu0 0
    %222 = vmatprep.subr.bf16.mxu0 %v182
    %223 = vmatpush1.bf16.msra.mxu0 %v181
    %224 = vmatprep.subr.bf16.mxu0 %v178
    %225 = vmatpush1.bf16.msra.mxu0 %v177
    %226 = vmatprep.subr.bf16.mxu0 %v174
    %227 = vmatpush1.bf16.msra.mxu0 %v173
    %228 = vmatprep.subr.bf16.mxu0 %v170
    %229 = vmatpush1.bf16.msra.mxu0 %v169
    %230 = vmatprep.subr.bf16.mxu0 0
    %231 = vmatpush2.bf16.msra.mxu0 0
    %232 = vmatprep.subr.bf16.mxu0 0
    %233 = vmatpush2.bf16.msra.mxu0 0
    %234 = vmatprep.subr.bf16.mxu0 0
    %235 = vmatpush2.bf16.msra.mxu0 0
    %236 = vmatprep.subr.bf16.mxu0 0
    %237 = vmatpush2.bf16.msra.mxu0 0
    %238 = vmatprep.subr.bf16.mxu0 0
    %239 = vmatpush2.bf16.msra.mxu0 0
    %240 = vmatprep.subr.bf16.mxu0 0
    %241 = vmatpush2.bf16.msra.mxu0 0
    %242 = vmatprep.subr.bf16.mxu0 0
    %243 = vmatpush2.bf16.msra.mxu0 0
    %244 = vmatprep.subr.bf16.mxu0 0
    %245 = vmatpush2.bf16.msra.mxu0 0
    %246 = vmatprep.mubr.bf16.mxu0 0
    %247 = vmatmul.mubr.bf16.gmra.mxu0 %v203
    %v248 = vpop.f32.mrf.mxu0
    %v249 = vadd.f32 %v84, %v248
    %v250 = vpop.f32.mrf.mxu0
    %v251 = vadd.f32 %v88, %v250
    %v252 = vpop.f32.mrf.mxu0
    %v253 = vadd.f32 %v84, %v252
    %v254 = vpop.f32.mrf.mxu0
    %v255 = vadd.f32 %v88, %v254
    %256 = vmatprep.mubr.bf16.mxu0 0
    %257 = vmatmul.mubr.bf16.gmra.mxu0 %v206
    %v258 = vpop.f32.mrf.mxu0
    %v259 = vadd.f32 %v84, %v258
    %v260 = vpop.f32.mrf.mxu0
    %v261 = vadd.f32 %v88, %v260
    %v262 = vpop.f32.mrf.mxu0
    %v263 = vadd.f32 %v84, %v262
    %v264 = vpop.f32.mrf.mxu0
    %v265 = vadd.f32 %v88, %v264
    %266 = vmatprep.mubr.bf16.mxu0 0
    %267 = vmatmul.mubr.bf16.gmra.mxu0 %v209
    %v268 = vpop.f32.mrf.mxu0
    %v269 = vadd.f32 %v84, %v268
    %v270 = vpop.f32.mrf.mxu0
    %v271 = vadd.f32 %v88, %v270
    %v272 = vpop.f32.mrf.mxu0
    %v273 = vadd.f32 %v84, %v272
    %v274 = vpop.f32.mrf.mxu0
    %v275 = vadd.f32 %v88, %v274
    %276 = vmatprep.mubr.bf16.mxu0 0
    %277 = vmatmul.mubr.bf16.gmra.mxu0 %v212
    %v278 = vpop.f32.mrf.mxu0
    %v279 = vadd.f32 %v84, %v278
    %v280 = vpop.f32.mrf.mxu0
    %v281 = vadd.f32 %v88, %v280
    %v282 = vpop.f32.mrf.mxu0
    %v283 = vadd.f32 %v84, %v282
    %v284 = vpop.f32.mrf.mxu0
    %v285 = vadd.f32 %v88, %v284
    %286 = vdwg.mxu0
    %287 = vmatprep.subr.bf16.mxu0 0
    %288 = vmatpush1.bf16.msra.mxu0 0
    %289 = vmatprep.subr.bf16.mxu0 0
    %290 = vmatpush1.bf16.msra.mxu0 0
    %291 = vmatprep.subr.bf16.mxu0 0
    %292 = vmatpush1.bf16.msra.mxu0 0
    %293 = vmatprep.subr.bf16.mxu0 0
    %294 = vmatpush1.bf16.msra.mxu0 0
    %295 = vmatprep.subr.bf16.mxu0 %v184
    %296 = vmatpush1.bf16.msra.mxu0 %v183
    %297 = vmatprep.subr.bf16.mxu0 %v180
    %298 = vmatpush1.bf16.msra.mxu0 %v179
    %299 = vmatprep.subr.bf16.mxu0 %v176
    %300 = vmatpush1.bf16.msra.mxu0 %v175
    %301 = vmatprep.subr.bf16.mxu0 %v172
    %302 = vmatpush1.bf16.msra.mxu0 %v171
    %303 = vmatprep.subr.bf16.mxu0 0
    %304 = vmatpush2.bf16.msra.mxu0 0
    %305 = vmatprep.subr.bf16.mxu0 0
    %306 = vmatpush2.bf16.msra.mxu0 0
    %307 = vmatprep.subr.bf16.mxu0 0
    %308 = vmatpush2.bf16.msra.mxu0 0
    %309 = vmatprep.subr.bf16.mxu0 0
    %310 = vmatpush2.bf16.msra.mxu0 0
    %311 = vmatprep.subr.bf16.mxu0 0
    %312 = vmatpush2.bf16.msra.mxu0 0
    %313 = vmatprep.subr.bf16.mxu0 0
    %314 = vmatpush2.bf16.msra.mxu0 0
    %315 = vmatprep.subr.bf16.mxu0 0
    %316 = vmatpush2.bf16.msra.mxu0 0
    %317 = vmatprep.subr.bf16.mxu0 0
    %318 = vmatpush2.bf16.msra.mxu0 0
    %319 = vmatprep.mubr.bf16.mxu0 0
    %320 = vmatmul.mubr.bf16.gmra.mxu0 %v203
    %v321 = vpop.f32.mrf.mxu0
    %v322 = vadd.f32 %v92, %v321
    %v323 = vpop.f32.mrf.mxu0
    %v324 = vadd.f32 %v96, %v323
    %v325 = vpop.f32.mrf.mxu0
    %v326 = vadd.f32 %v92, %v325
    %v327 = vpop.f32.mrf.mxu0
    %v328 = vadd.f32 %v96, %v327
    %329 = vmatprep.mubr.bf16.mxu0 0
    %330 = vmatmul.mubr.bf16.gmra.mxu0 %v206
    %v331 = vpop.f32.mrf.mxu0
    %v332 = vadd.f32 %v92, %v331
    %v333 = vpop.f32.mrf.mxu0
    %v334 = vadd.f32 %v96, %v333
    %v335 = vpop.f32.mrf.mxu0
    %v336 = vadd.f32 %v92, %v335
    %v337 = vpop.f32.mrf.mxu0
    %v338 = vadd.f32 %v96, %v337
    %339 = vmatprep.mubr.bf16.mxu0 0
    %340 = vmatmul.mubr.bf16.gmra.mxu0 %v209
    %v341 = vpop.f32.mrf.mxu0
    %v342 = vadd.f32 %v92, %v341
    %v343 = vpop.f32.mrf.mxu0
    %v344 = vadd.f32 %v96, %v343
    %v345 = vpop.f32.mrf.mxu0
    %v346 = vadd.f32 %v92, %v345
    %v347 = vpop.f32.mrf.mxu0
    %v348 = vadd.f32 %v96, %v347
    %349 = vmatprep.mubr.bf16.mxu0 0
    %350 = vmatmul.mubr.bf16.gmra.mxu0 %v212
    %v351 = vpop.f32.mrf.mxu0
    %v352 = vadd.f32 %v92, %v351
    %v353 = vpop.f32.mrf.mxu0
    %v354 = vadd.f32 %v96, %v353
    %v355 = vpop.f32.mrf.mxu0
    %v356 = vadd.f32 %v92, %v355
    %v357 = vpop.f32.mrf.mxu0
    %v358 = vadd.f32 %v96, %v357
    %359 = vdwg.mxu0
    %v360 = vpack.c.bf16 %v253, %v249
    %v361 = vpack.c.bf16 %v255, %v251
    %v362 = vpack.c.bf16 %v326, %v322
    %v363 = vpack.c.bf16 %v328, %v324
    %v364 = vpack.c.bf16 %v263, %v259
    %v365 = vpack.c.bf16 %v265, %v261
    %v366 = vpack.c.bf16 %v336, %v332
    %v367 = vpack.c.bf16 %v338, %v334
    %v368 = vpack.c.bf16 %v273, %v269
    %v369 = vpack.c.bf16 %v275, %v271
    %v370 = vpack.c.bf16 %v346, %v342
    %v371 = vpack.c.bf16 %v348, %v344
    %v372 = vpack.c.bf16 %v283, %v279
    %v373 = vpack.c.bf16 %v285, %v281
    %v374 = vpack.c.bf16 %v356, %v352
    %v375 = vpack.c.bf16 %v358, %v354
    %v392 = vunpack.c.l.b16 %v360
    %v393 = vunpack.c.l.b16 %v361
    %v394 = vunpack.c.l.b16 %v362
    %v395 = vunpack.c.l.b16 %v363
    %v396 = vunpack.c.h.b16 %v360
    %v397 = vunpack.c.h.b16 %v361
    %v398 = vunpack.c.h.b16 %v362
    %v399 = vunpack.c.h.b16 %v363
    %v400 = vunpack.c.l.b16 %v364
    %v401 = vunpack.c.l.b16 %v365
    %v402 = vunpack.c.l.b16 %v366
    %v403 = vunpack.c.l.b16 %v367
    %v404 = vunpack.c.h.b16 %v364
    %v405 = vunpack.c.h.b16 %v365
    %v406 = vunpack.c.h.b16 %v366
    %v407 = vunpack.c.h.b16 %v367
    %v408 = vunpack.c.l.b16 %v368
    %v409 = vunpack.c.l.b16 %v369
    %v410 = vunpack.c.l.b16 %v370
    %v411 = vunpack.c.l.b16 %v371
    %v412 = vunpack.c.h.b16 %v368
    %v413 = vunpack.c.h.b16 %v369
    %v414 = vunpack.c.h.b16 %v370
    %v415 = vunpack.c.h.b16 %v371
    %v416 = vunpack.c.l.b16 %v372
    %v417 = vunpack.c.l.b16 %v373
    %v418 = vunpack.c.l.b16 %v374
    %v419 = vunpack.c.l.b16 %v375
    %v420 = vunpack.c.h.b16 %v372
    %v421 = vunpack.c.h.b16 %v373
    %v422 = vunpack.c.h.b16 %v374
    %v423 = vunpack.c.h.b16 %v375
    %v424 = vpack.c.b16 %v393, %v392
    %v425 = vpack.c.b16 %v395, %v394
    %v426 = vpack.c.b16 %v397, %v396
    %v427 = vpack.c.b16 %v399, %v398
    %v428 = vpack.c.b16 %v401, %v400
    %v429 = vpack.c.b16 %v403, %v402
    %v430 = vpack.c.b16 %v405, %v404
    %v431 = vpack.c.b16 %v407, %v406
    %v432 = vpack.c.b16 %v409, %v408
    %v433 = vpack.c.b16 %v411, %v410
    %v434 = vpack.c.b16 %v413, %v412
    %v435 = vpack.c.b16 %v415, %v414
    %v436 = vpack.c.b16 %v417, %v416
    %v437 = vpack.c.b16 %v419, %v418
    %v438 = vpack.c.b16 %v421, %v420
    %v439 = vpack.c.b16 %v423, %v422
    %456 = vst [vmem:[#allocation8] sm:$0xff] %v424
    %457 = vst [vmem:[#allocation8 + $0x8] sm:$0xff] %v425
    %458 = vst [vmem:[#allocation8 + $0x10] sm:$0xff] %v426
    %459 = vst [vmem:[#allocation8 + $0x18] sm:$0xff] %v427
    %460 = vst [vmem:[#allocation8 + $0x20] sm:$0xff] %v428
    %461 = vst [vmem:[#allocation8 + $0x28] sm:$0xff] %v429
    %462 = vst [vmem:[#allocation8 + $0x30] sm:$0xff] %v430
    %463 = vst [vmem:[#allocation8 + $0x38] sm:$0xff] %v431
    %464 = vst [vmem:[#allocation8 + $0x40] sm:$0xff] %v432
    %465 = vst [vmem:[#allocation8 + $0x48] sm:$0xff] %v433
    %466 = vst [vmem:[#allocation8 + $0x50] sm:$0xff] %v434
    %467 = vst [vmem:[#allocation8 + $0x58] sm:$0xff] %v435
    %468 = vst [vmem:[#allocation8 + $0x60] sm:$0xff] %v436
    %469 = vst [vmem:[#allocation8 + $0x68] sm:$0xff] %v437
    %470 = vst [vmem:[#allocation8 + $0x70] sm:$0xff] %v438
    %471 = vst [vmem:[#allocation8 + $0x78] sm:$0xff] %v439
    // Predicated region
    $region26: #{tpu_custom_call.1} parent=1 // pred_check
      _
    $region27: #{tpu_custom_call.1} parent=1 // pred_check_branch
      %473 = sbr.rel (0) target = $region29
    $region28: #{tpu_custom_call.1} parent=1 // pred_region
      %s475 = ssub.s32 2048, 2048
      %476 = vsyncadd [#allocation4], %s475
      %s477 = sshll.u32 [#allocation8], 4
      %s478 = int_to_ptr.vmem [resolvable:$true] %s477
      %483 = dma.vmem_to_hbm [thread:$0]  %s478, 2048, %s3, [#allocation4], 256, 256, 16
    $region29: #{tpu_custom_call.1} parent=1 // pred_fallthru
      _
    // Predicated region
    $region30: #{tpu_custom_call.1} parent=1 // pred_check
      _
    $region31: #{tpu_custom_call.1} parent=1 // pred_check_branch
      %485 = sbr.rel (0) target = $region33
    $region32: #{tpu_custom_call.1} parent=1 // pred_region
      %486 = dma.done [#allocation4], 2048
    $region33: #{tpu_custom_call.1} parent=1 // pred_fallthru
      _
    %487 = vsyncpa [#allocation3], 1
    %488 = vsyncpa [#allocation6], 1
    %489 = vsyncpa [#allocation4], 1

</llo_original>
